<compile_context>
chip_gen: v7x
topology: tpu7x:2x2x1
jax: 0.10.0
libtpu: 0.0.40
codegen_flags: <defaults>
</compile_context>

<pallas_src>
import functools

import jax
import jax.numpy as jnp
from jax.experimental import pallas as pl
from jax.experimental.pallas import tpu as pltpu


# ---------------------------------------------------------------------------
# helpers
# ---------------------------------------------------------------------------
def _round_up(x, m):
    return ((x + m - 1) // m) * m


def _pick_tile(dim, prefs):
    """Largest preferred tile that divides `dim` (dim is already 128-padded)."""
    for t in prefs:
        if dim % t == 0:
            return t
    return dim


def _vmem_capacity_bytes():
    """Per-generation VMEM capacity; conservative default if unavailable."""
    try:
        info = pltpu.get_tpu_info()
        for name in ("vmem_capacity_bytes", "vmem_bytes", "vmem_size_bytes"):
            v = getattr(info, name, None)
            if v:
                return int(v)
    except Exception:
        pass
    return 64 * 1024 * 1024  # v7x-sized fallback: safe on every generation


_VMEM_CAP = _vmem_capacity_bytes()
# Scoped VMEM limit handed to Mosaic (leave headroom for internal scratch):
# ~48 MiB on v7x, ~96 MiB on v5e/v6e.
_VMEM_LIMIT = min(_VMEM_CAP * 3 // 4, 112 * 1024 * 1024)
# Budget used when sizing our own tiles / resident operands / scratch.
_TILE_BUDGET = _VMEM_LIMIT * 4 // 5


# ---------------------------------------------------------------------------
# Pallas kernels
# ---------------------------------------------------------------------------
def _fused_layer_kernel(a_ref, h_ref, w_ref, b_ref, o_ref, hw_ref, *,
                        apply_relu):
    """One whole GCN layer per call; grid is 1-D over A_hat row panels.

    hw_ref is a persistent VMEM scratch holding HW = H @ W, computed once on
    the first row panel and reused by all later panels (hence the grid axis
    is sequential / "arbitrary").
    """
    @pl.when(pl.program_id(0) == 0)
    def _():
        hw_ref[...] = jnp.dot(
            h_ref[...], w_ref[...],
            preferred_element_type=jnp.float32).astype(jnp.bfloat16)

    out = jnp.dot(a_ref[...], hw_ref[...], preferred_element_type=jnp.float32)
    out = out + b_ref[...]                  # (1, F_out) broadcasts over rows
    if apply_relu:
        out = jnp.maximum(out, 0.0)
    o_ref[...] = out.astype(o_ref.dtype)


def _matmul_kernel(*refs, apply_relu, has_bias, multi_k):
    """out = a @ b (+ bias) (+ ReLU), bf16 operands, f32 accumulation.

    multi_k=False: single reduction step -> write straight to o_ref (no f32
    accumulator round-trip).  multi_k=True: classic (i, j, k) accumulation
    with @pl.when init / finalize; bias and ReLU fused into the finalize.
    """
    if multi_k:
        *refs, acc_ref = refs
    if has_bias:
        a_ref, b_ref, bias_ref, o_ref = refs
    else:
        a_ref, b_ref, o_ref = refs

    def epilogue(acc):
        out = acc
        if has_bias:
            out = out + bias_ref[...]
        if apply_relu:
            out = jnp.maximum(out, 0.0)
        o_ref[...] = out.astype(o_ref.dtype)

    if multi_k:
        @pl.when(pl.program_id(2) == 0)
        def _():
            acc_ref[...] = jnp.zeros_like(acc_ref)

        acc_ref[...] += jnp.dot(a_ref[...], b_ref[...],
                                preferred_element_type=jnp.float32)

        @pl.when(pl.program_id(2) == pl.num_programs(2) - 1)
        def _():
            epilogue(acc_ref[...])
    else:
        epilogue(jnp.dot(a_ref[...], b_ref[...],
                         preferred_element_type=jnp.float32))


# ---------------------------------------------------------------------------
# pallas_call wrappers
# ---------------------------------------------------------------------------
def fused_gcn_layer(a_hat, h, w, bias, *, apply_relu, out_dtype):
    """Single-call GCN layer; returns None if the working set exceeds VMEM."""
    M, K = a_hat.shape                 # K == M == n_pad
    Kh, f_in = h.shape
    f_in2, f_out = w.shape
    assert Kh == K and f_in2 == f_in and bias.shape == (1, f_out)
    ob = jnp.dtype(out_dtype).itemsize

    # conservatively count the constant-index inputs as double-buffered
    resident = (2 * K * f_in * 2          # H
                + 2 * f_in * f_out * 2    # W
                + K * f_out * 2           # HW scratch (bf16, single)
                + 2 * f_out * 4)          # bias

    def fits(tm):
        return (resident
                + 2 * tm * K * 2          # A_hat row panel, double-buffered
                + 2 * tm * f_out * ob     # output panel, double-buffered
                ) <= _TILE_BUDGET

    tm = next((t for t in (1024, 512, 256, 128) if M % t == 0 and fits(t)),
              None)
    if tm is None:
        return None

    kernel = functools.partial(_fused_layer_kernel, apply_relu=apply_relu)
    return pl.pallas_call(
        kernel,
        out_shape=jax.ShapeDtypeStruct((M, f_out), out_dtype),
        grid_spec=pltpu.PrefetchScalarGridSpec(
            num_scalar_prefetch=0,
            grid=(M // tm,),
            in_specs=[
                pl.BlockSpec((tm, K), lambda i: (i, 0)),        # A_hat panel
                pl.BlockSpec((K, f_in), lambda i: (0, 0)),      # H (resident)
                pl.BlockSpec((f_in, f_out), lambda i: (0, 0)),  # W (resident)
                pl.BlockSpec((1, f_out), lambda i: (0, 0)),     # bias row
            ],
            out_specs=pl.BlockSpec((tm, f_out), lambda i: (i, 0)),
            scratch_shapes=[pltpu.VMEM((K, f_out), jnp.bfloat16)],
        ),
        compiler_params=pltpu.CompilerParams(
            # sequential: panel 0 produces the HW scratch used by later panels
            dimension_semantics=("arbitrary",),
            vmem_limit_bytes=_VMEM_LIMIT,
        ),
    )(a_hat, h, w, bias)


def pallas_matmul(a, b, bias=None, *, apply_relu=False,
                  out_dtype=jnp.bfloat16):
    """Tiled  a @ b (+ bias) (+ ReLU).  Shapes already padded to 128-multiples.

    Prefers tn = N / tk = K (full-width lane-dense output, B VMEM-resident and
    fetched from HBM exactly once, single reduction step, no accumulator);
    falls back to general (i, j, k) tiling with an f32 accumulator otherwise.
    """
    M, K = a.shape
    K2, N = b.shape
    assert K == K2
    has_bias = bias is not None
    ob = jnp.dtype(out_dtype).itemsize
    ab = jnp.dtype(a.dtype).itemsize
    bb = jnp.dtype(b.dtype).itemsize

    def fits_collapsed(tm):
        return (2 * tm * K * ab            # A row panel, double-buffered
                + 2 * K * N * bb           # B (conservatively doubled)
                + (2 * N * 4 if has_bias else 0)
                + 2 * tm * N * ob          # output panel, double-buffered
                ) <= _TILE_BUDGET

    cands = [t for t in (1024, 512, 256, 128)
             if M % t == 0 and fits_collapsed(t)]
    if cands:
        tm = cands[0]
        # Prefer an even number of row panels (v7x megacore: 2 TensorCores get
        # equal halves of the "parallel" i axis); don't shrink below 256 rows.
        if (M // tm) % 2 == 1:
            for t in cands[1:]:
                if t >= 256 and (M // t) % 2 == 0:
                    tm = t
                    break
        tn, tk = N, K
        multi_k = False
    else:
        tm = _pick_tile(M, (512, 256, 128))
        tn = _pick_tile(N, (512, 256, 128))
        tk = _pick_tile(K, (1024, 512, 256, 128))
        multi_k = (K // tk) > 1

    grid = (M // tm, N // tn, K // tk)

    in_specs = [
        pl.BlockSpec((tm, tk), lambda i, j, k: (i, k)),
        pl.BlockSpec((tk, tn), lambda i, j, k: (k, j)),
    ]
    args = [a, b]
    if has_bias:
        in_specs.append(pl.BlockSpec((1, tn), lambda i, j, k: (0, j)))
        args.append(bias)

    scratch = [pltpu.VMEM((tm, tn), jnp.float32)] if multi_k else []

    kernel = functools.partial(_matmul_kernel, apply_relu=apply_relu,
                               has_bias=has_bias, multi_k=multi_k)
    return pl.pallas_call(
        kernel,
        out_shape=jax.ShapeDtypeStruct((M, N), out_dtype),
        grid_spec=pltpu.PrefetchScalarGridSpec(
            num_scalar_prefetch=0,
            grid=grid,
            in_specs=in_specs,
            out_specs=pl.BlockSpec((tm, tn), lambda i, j, k: (i, j)),
            scratch_shapes=scratch,
        ),
        compiler_params=pltpu.CompilerParams(
            dimension_semantics=("parallel", "parallel", "arbitrary"),
            vmem_limit_bytes=_VMEM_LIMIT,
        ),
    )(*args)


def gcn_layer(a_hat, h, w, bias, *, apply_relu, out_dtype):
    """One GCNConv layer: A_hat @ (H @ W) + b (+ ReLU)."""
    out = fused_gcn_layer(a_hat, h, w, bias,
                          apply_relu=apply_relu, out_dtype=out_dtype)
    if out is not None:
        return out
    # Graph too large for the fused working set: two-stage tiled path.
    hw = pallas_matmul(h, w, out_dtype=jnp.bfloat16)
    return pallas_matmul(a_hat, hw, bias,
                         apply_relu=apply_relu, out_dtype=out_dtype)


# ---------------------------------------------------------------------------
# Host-side glue: sparse (edge_index, edge_weight) -> padded, normalized,
# bf16 dense adjacency.  Mirrors torch_geometric GCNConv's gcn_norm with
# add_self_loops=True (symmetric normalization, self-loop weight 1):
#     A_hat[dst, src] = deg^{-1/2}[dst] * w * deg^{-1/2}[src]
# Built directly into the padded buffer and cast once (single N^2 f32 temp).
# ---------------------------------------------------------------------------
def gcn_norm_dense_padded(edge_index, edge_weight, num_nodes, n_pad):
    src = edge_index[0]
    dst = edge_index[1]
    a = jnp.zeros((n_pad, n_pad), jnp.float32)
    a = a.at[dst, src].add(edge_weight.astype(jnp.float32))
    idx = jnp.arange(num_nodes)
    a = a.at[idx, idx].add(1.0)                      # self loops, weight 1
    deg = a.sum(axis=1)                              # padded rows stay 0
    dinv_sqrt = jnp.where(deg > 0.0, jax.lax.rsqrt(deg), 0.0)
    a = dinv_sqrt[:, None] * a * dinv_sqrt[None, :]
    return a.astype(jnp.bfloat16)

# TODO(synk): for genuinely sparse / very large graphs this dense O(N^2)
# formulation should become a scalar-prefetch gather SpMM.


# ---------------------------------------------------------------------------
# Model: GCNTorch forward (GCNConv -> act -> [GCNConv -> act -> drop]* -> GCNConv)
# ---------------------------------------------------------------------------
class GCNPallas:
    def __init__(self, in_feats, n_hidden, n_classes, n_layers, key):
        dims = [in_feats] + [n_hidden] * n_layers + [n_classes]
        self.dims = dims
        self.dims_pad = [_round_up(d, 128) for d in dims]
        self.weights = []       # bf16, zero-padded to (F_in_pad, F_out_pad)
        self.biases = []        # f32, (1, F_out_pad)
        self.weights_f32 = []   # unpadded, for the pure-JAX reference check
        self.biases_f32 = []
        for fi, fo in zip(dims[:-1], dims[1:]):
            key, wk = jax.random.split(key)
            # glorot-uniform init (as in GCNConv), deterministic from key
            limit = (6.0 / (fi + fo)) ** 0.5
            w = jax.random.uniform(wk, (fi, fo), jnp.float32, -limit, limit)
            b = jnp.zeros((fo,), jnp.float32)
            fi_p, fo_p = _round_up(fi, 128), _round_up(fo, 128)
            w_pad = jnp.zeros((fi_p, fo_p), jnp.float32).at[:fi, :fo].set(w)
            b_pad = jnp.zeros((1, fo_p), jnp.float32).at[0, :fo].set(b)
            self.weights.append(w_pad.astype(jnp.bfloat16))
            self.biases.append(b_pad)
            self.weights_f32.append(w)
            self.biases_f32.append(b)

    def __call__(self, features, edge_index, edge_weight):
        n, f_in = features.shape
        n_pad = _round_up(n, 128)

        # Normalized adjacency: built once (padded, bf16); the same HBM copy
        # is reused by every layer.  TODO(synk): cache across calls when the
        # graph is static.
        a_hat = gcn_norm_dense_padded(edge_index, edge_weight, n, n_pad)

        h = jnp.zeros((n_pad, self.dims_pad[0]), jnp.bfloat16)
        h = h.at[:n, :f_in].set(features.astype(jnp.bfloat16))

        n_convs = len(self.weights)
        for i in range(n_convs):
            is_last = i == n_convs - 1
            out_dtype = jnp.float32 if is_last else jnp.bfloat16
            h = gcn_layer(a_hat, h, self.weights[i], self.biases[i],
                          apply_relu=not is_last, out_dtype=out_dtype)
            # nn.Dropout: identity at inference (eval) time -> no-op.
        return h[:n, : self.dims[-1]]


# ---------------------------------------------------------------------------
# pure-JAX float32 reference (same dense GCN math) for a loose sanity check
# ---------------------------------------------------------------------------
def _reference_forward(features, edge_index, edge_weight, weights, biases):
    n = features.shape[0]
    src, dst = edge_index[0], edge_index[1]
    a = jnp.zeros((n, n), jnp.float32).at[dst, src].add(
        edge_weight.astype(jnp.float32))
    idx = jnp.arange(n)
    a = a.at[idx, idx].add(1.0)
    deg = a.sum(axis=1)
    dinv = jnp.where(deg > 0.0, jax.lax.rsqrt(deg), 0.0)
    a = dinv[:, None] * a * dinv[None, :]
    h = features.astype(jnp.float32)
    for i, (w, b) in enumerate(zip(weights, biases)):
        h = a @ (h @ w) + b
        if i < len(weights) - 1:
            h = jnp.maximum(h, 0.0)
    return h


if __name__ == "__main__":
    key = jax.random.PRNGKey(0)

    # small, module-consistent shapes
    num_nodes = 16
    in_feats = 8
    n_hidden = 32
    n_classes = 8
    n_layers = 2
    num_edges = 40

    k_feat, k_src, k_dst, k_w, k_param = jax.random.split(key, 5)
    features = jax.random.normal(k_feat, (num_nodes, in_feats), jnp.float32)
    src = jax.random.randint(k_src, (num_edges,), 0, num_nodes, jnp.int32)
    dst = jax.random.randint(k_dst, (num_edges,), 0, num_nodes, jnp.int32)
    edge_index = jnp.stack([src, dst], axis=0)                 # (2, E)
    edge_weight = jax.random.uniform(k_w, (num_edges,), jnp.float32, 0.1, 1.0)

    model = GCNPallas(in_feats, n_hidden, n_classes, n_layers, k_param)

    out = model(features, edge_index, edge_weight)
    out = jax.block_until_ready(out)
    assert out.shape == (num_nodes, n_classes), out.shape
    assert bool(jnp.all(jnp.isfinite(out)))

    # loose (bf16 operand) tolerance check against the float32 reference
    ref = _reference_forward(features, edge_index, edge_weight,
                             model.weights_f32, model.biases_f32)
    err = float(jnp.max(jnp.abs(out - ref)) / (jnp.max(jnp.abs(ref)) + 1e-6))
    assert err < 0.1, f"relative error too large: {err}"

    print("KERNEL_OK")
</pallas_src>

<mosaic_0001>
module attributes {stable_mosaic.version = 11 : i64} {
  func.func @_fused_layer_kernel(%arg0: i32, %arg1: memref<128x128xbf16, #tpu.memory_space<vmem>>, %arg2: memref<128x128xbf16, #tpu.memory_space<vmem>>, %arg3: memref<128x128xbf16, #tpu.memory_space<vmem>>, %arg4: memref<1x128xf32, #tpu.memory_space<vmem>>, %arg5: memref<128x128xbf16, #tpu.memory_space<vmem>>, %arg6: memref<128x128xbf16, #tpu.memory_space<vmem>>) attributes {dimension_semantics = [#tpu.dimension_semantics<arbitrary>], iteration_bounds = array<i64: 1>, scalar_prefetch = 0 : i64, scratch_operands = 1 : i64, tpu.core_type = #tpu.core_type<tc>, window_params = [{transform_indices = @transform_0, window_bounds = array<i64: 128, 128>}, {pipeline_mode = #tpu.pipeline_mode<synchronous>, transform_indices = @transform_1, window_bounds = array<i64: 128, 128>}, {pipeline_mode = #tpu.pipeline_mode<synchronous>, transform_indices = @transform_2, window_bounds = array<i64: 128, 128>}, {pipeline_mode = #tpu.pipeline_mode<synchronous>, transform_indices = @transform_3, window_bounds = array<i64: 1, 128>}, {transform_indices = @transform_4, window_bounds = array<i64: 128, 128>}]} {
    %c0_i32 = arith.constant 0 : i32
    %0 = arith.cmpi eq, %arg0, %c0_i32 : i32
    %1 = arith.extui %0 : i1 to i32
    %c0_i32_0 = arith.constant 0 : i32
    %2 = arith.cmpi ne, %1, %c0_i32_0 : i32
    scf.if %2 {
      %c0_9 = arith.constant 0 : index
      %c0_10 = arith.constant 0 : index
      %13 = vector.load %arg2[%c0_9, %c0_10] : memref<128x128xbf16, #tpu.memory_space<vmem>>, vector<128x128xbf16>
      %c0_11 = arith.constant 0 : index
      %c0_12 = arith.constant 0 : index
      %14 = vector.load %arg3[%c0_11, %c0_12] : memref<128x128xbf16, #tpu.memory_space<vmem>>, vector<128x128xbf16>
      %cst_13 = arith.constant dense<0.000000e+00> : vector<128x128xf32>
      %15 = tpu.matmul %13, %14, %cst_13 {dimension_numbers = #tpu.dot_dimension_numbers<[1], [0], [0], [1], [0, 0, 1, 1], [], []>} : vector<128x128xbf16>, vector<128x128xbf16>, vector<128x128xf32> -> vector<128x128xf32>
      %16 = arith.truncf %15 : vector<128x128xf32> to vector<128x128xbf16>
      %c0_14 = arith.constant 0 : index
      %c0_15 = arith.constant 0 : index
      %17 = vector.load %arg6[%c0_14, %c0_15] : memref<128x128xbf16, #tpu.memory_space<vmem>>, vector<128x128xbf16>
      tpu.vector_store %arg6[%c0_14, %c0_15], %16 {strides = array<i32>} : memref<128x128xbf16, #tpu.memory_space<vmem>>, vector<128x128xbf16>,
    } else {
    }
    %c0 = arith.constant 0 : index
    %c0_1 = arith.constant 0 : index
    %3 = vector.load %arg1[%c0, %c0_1] : memref<128x128xbf16, #tpu.memory_space<vmem>>, vector<128x128xbf16>
    %c0_2 = arith.constant 0 : index
    %c0_3 = arith.constant 0 : index
    %4 = vector.load %arg6[%c0_2, %c0_3] : memref<128x128xbf16, #tpu.memory_space<vmem>>, vector<128x128xbf16>
    %cst = arith.constant dense<0.000000e+00> : vector<128x128xf32>
    %5 = tpu.matmul %3, %4, %cst {dimension_numbers = #tpu.dot_dimension_numbers<[1], [0], [0], [1], [0, 0, 1, 1], [], []>} : vector<128x128xbf16>, vector<128x128xbf16>, vector<128x128xf32> -> vector<128x128xf32>
    %c0_4 = arith.constant 0 : index
    %c0_5 = arith.constant 0 : index
    %6 = vector.load %arg4[%c0_4, %c0_5] : memref<1x128xf32, #tpu.memory_space<vmem>>, vector<1x128xf32>
    %7 = vector.broadcast %6 : vector<1x128xf32> to vector<128x128xf32>
    %8 = arith.addf %5, %7 : vector<128x128xf32>
    %cst_6 = arith.constant 0.000000e+00 : f32
    %9 = vector.broadcast %cst_6 : f32 to vector<128x128xf32>
    %10 = arith.maximumf %8, %9 : vector<128x128xf32>
    %11 = arith.truncf %10 : vector<128x128xf32> to vector<128x128xbf16>
    %c0_7 = arith.constant 0 : index
    %c0_8 = arith.constant 0 : index
    %12 = vector.load %arg5[%c0_7, %c0_8] : memref<128x128xbf16, #tpu.memory_space<vmem>>, vector<128x128xbf16>
    tpu.vector_store %arg5[%c0_7, %c0_8], %11 {strides = array<i32>} : memref<128x128xbf16, #tpu.memory_space<vmem>>, vector<128x128xbf16>,
    return
  }
  func.func @transform_0(%arg0: i32) -> (i32, i32) {
    %c0_i32 = arith.constant 0 : i32
    %c0_i32_0 = arith.constant 0 : i32
    return %arg0, %c0_i32 : i32, i32
  }
  func.func @transform_1(%arg0: i32) -> (i32, i32) {
    %c0_i32 = arith.constant 0 : i32
    %c0_i32_0 = arith.constant 0 : i32
    %c0_i32_1 = arith.constant 0 : i32
    return %c0_i32, %c0_i32_0 : i32, i32
  }
  func.func @transform_2(%arg0: i32) -> (i32, i32) {
    %c0_i32 = arith.constant 0 : i32
    %c0_i32_0 = arith.constant 0 : i32
    %c0_i32_1 = arith.constant 0 : i32
    return %c0_i32, %c0_i32_0 : i32, i32
  }
  func.func @transform_3(%arg0: i32) -> (i32, i32) {
    %c0_i32 = arith.constant 0 : i32
    %c0_i32_0 = arith.constant 0 : i32
    %c0_i32_1 = arith.constant 0 : i32
    return %c0_i32, %c0_i32_0 : i32, i32
  }
  func.func @transform_4(%arg0: i32) -> (i32, i32) {
    %c0_i32 = arith.constant 0 : i32
    %c0_i32_0 = arith.constant 0 : i32
    return %arg0, %c0_i32 : i32, i32
  }
}

</mosaic_0001>

<llo_original>
// kernel: tpu_custom_call.1
$region0: #{tpu_custom_call.1}
  #allocation0 [shape = 'u32[]', space=smem, size = 0x4, offset = 0x4, fixed_abs, tag = 'smem constant byte address 0x4 - core index']
  #allocation1 [shape = 'u32[144,128]{1,0:T(1,128)}', space=vmem, size = 0x12000, scoped, tag = 'internal scratch']
  #allocation2 [shape = 'bf16[128,128]{1,0:T(16,128)(2,1)}', space=vmem, size = 0x8000, scoped, tag = 'scratch operand']
  %s0 = inlined_call_operand.hbm [shape: bf16[128,128], index: 0, kind: input, shape index: {}]
  %s1 = inlined_call_operand.hbm [shape: bf16[128,128], index: 1, kind: input, shape index: {}]
  %s2 = inlined_call_operand.hbm [shape: bf16[128,128], index: 2, kind: input, shape index: {}]
  %s3 = inlined_call_operand.vmem [shape: f32[1,128], index: 3, kind: input, shape index: {}]
  %s4 = inlined_call_operand.hbm [shape: bf16[128,128], index: 4, kind: output, shape index: {}]
  %s5 = sld [smem:[#allocation0]]
  $region42: #{tpu_custom_call.1} parent=0
    _
  %s7 = ssub.s32 1, %s5
  %s8 = scalar_select 0, %s7, %s5
  $region1: #{tpu_custom_call.1} parent=0
    #allocation3 [shape = 'u8[32768]{0}', space=vmem, size = 0x8000, scoped, tag = 'input window, operand 0, single buffered']
    #allocation4 [shape = 's32[1]{0}', space=sflag, size = 0x4, scoped, tag = 'scoped memory for tpu_custom_call.1']
    #allocation5 [shape = 's32[1]{0}', space=sflag, size = 0x4, scoped, tag = 'scoped memory for tpu_custom_call.1']
    #allocation6 [shape = 'u8[32768]{0}', space=vmem, size = 0x8000, scoped, tag = 'input window, operand 1, single buffered']
    #allocation7 [shape = 's32[1]{0}', space=sflag, size = 0x4, scoped, tag = 'scoped memory for tpu_custom_call.1']
    #allocation8 [shape = 'u8[32768]{0}', space=vmem, size = 0x8000, scoped, tag = 'input window, operand 2, single buffered']
    #allocation9 [shape = 'u8[32768]{0}', space=vmem, size = 0x8000, scoped, tag = 'output window, operand 0, single buffered']
    %9 = vsyncpa [#allocation4], 0
    %10 = vsyncpa [#allocation7], 0
    %11 = vsyncpa [#allocation5], 0
    // Predicated region
    $region2: #{tpu_custom_call.1} parent=1 // pred_check
      _
    $region3: #{tpu_custom_call.1} parent=1 // pred_check_branch
      %13 = sbr.rel (0) target = $region5
    $region4: #{tpu_custom_call.1} parent=1 // pred_region
      %s15 = ssub.s32 1024, 1024
      %16 = vsyncadd [#allocation4], %s15
      %s17 = sshll.u32 [#allocation3], 4
      %s18 = int_to_ptr.vmem [resolvable:$true] %s17
      %23 = dma.hbm_to_vmem [thread:$0]  %s0, 1024, %s18, [#allocation4], 64, 64, 4
    $region5: #{tpu_custom_call.1} parent=1 // pred_fallthru
      _
    // Predicated region
    $region6: #{tpu_custom_call.1} parent=1 // pred_check
      _
    $region7: #{tpu_custom_call.1} parent=1 // pred_check_branch
      %25 = sbr.rel (0) target = $region9
    $region8: #{tpu_custom_call.1} parent=1 // pred_region
      %s27 = ssub.s32 1024, 1024
      %28 = vsyncadd [#allocation7], %s27
      %s29 = sshll.u32 [#allocation6], 4
      %s30 = int_to_ptr.vmem [resolvable:$true] %s29
      %35 = dma.hbm_to_vmem [thread:$0]  %s1, 1024, %s30, [#allocation7], 64, 64, 4
    $region9: #{tpu_custom_call.1} parent=1 // pred_fallthru
      _
    // Predicated region
    $region10: #{tpu_custom_call.1} parent=1 // pred_check
      _
    $region11: #{tpu_custom_call.1} parent=1 // pred_check_branch
      %37 = sbr.rel (0) target = $region13
    $region12: #{tpu_custom_call.1} parent=1 // pred_region
      %s39 = ssub.s32 1024, 1024
      %40 = vsyncadd [#allocation7], %s39
      %s41 = sshll.u32 [#allocation8], 4
      %s42 = int_to_ptr.vmem [resolvable:$true] %s41
      %47 = dma.hbm_to_vmem [thread:$0]  %s2, 1024, %s42, [#allocation7], 64, 64, 4
    $region13: #{tpu_custom_call.1} parent=1 // pred_fallthru
      _
    // Predicated region
    $region14: #{tpu_custom_call.1} parent=1 // pred_check
      _
    $region15: #{tpu_custom_call.1} parent=1 // pred_check_branch
      %49 = sbr.rel (0) target = $region17
    $region16: #{tpu_custom_call.1} parent=1 // pred_region
      _
    $region17: #{tpu_custom_call.1} parent=1 // pred_fallthru
      _
    // Predicated region
    $region18: #{tpu_custom_call.1} parent=1 // pred_check
      _
    $region19: #{tpu_custom_call.1} parent=1 // pred_check_branch
      %51 = sbr.rel (0) target = $region21
    $region20: #{tpu_custom_call.1} parent=1 // pred_region
      %52 = dma.done [#allocation4], 1024
    $region21: #{tpu_custom_call.1} parent=1 // pred_fallthru
      _
    // Predicated region
    $region22: #{tpu_custom_call.1} parent=1 // pred_check
      _
    $region23: #{tpu_custom_call.1} parent=1 // pred_check_branch
      %54 = sbr.rel (0) target = $region25
    $region24: #{tpu_custom_call.1} parent=1 // pred_region
      %55 = dma.done [#allocation7], 1024
    $region25: #{tpu_custom_call.1} parent=1 // pred_fallthru
      _
    // Predicated region
    $region26: #{tpu_custom_call.1} parent=1 // pred_check
      _
    $region27: #{tpu_custom_call.1} parent=1 // pred_check_branch
      %57 = sbr.rel (0) target = $region29
    $region28: #{tpu_custom_call.1} parent=1 // pred_region
      %58 = dma.done [#allocation7], 1024
    $region29: #{tpu_custom_call.1} parent=1 // pred_fallthru
      _
    %p60 = scmp.eq.s32.totalorder 0, 0
    // Predicated region
    $region30: #{tpu_custom_call.1} parent=1 // pred_check
      %p61 = pneg %p60
    $region31: #{tpu_custom_call.1} parent=1 // pred_check_branch
      %63 = sbr.rel (%p61) target = $region33
    $region32: #{tpu_custom_call.1} parent=1 // pred_region
      %v64 = vld [vmem:[#allocation6] sm:$0xf]
      %v65 = vld [vmem:[#allocation6 + $0x4] sm:$0xf]
      %v66 = vld [vmem:[#allocation6 + $0x8] sm:$0xf]
      %v67 = vld [vmem:[#allocation6 + $0xc] sm:$0xf]
      %v68 = vld [vmem:[#allocation6 + $0x10] sm:$0xf]
      %v69 = vld [vmem:[#allocation6 + $0x14] sm:$0xf]
      %v70 = vld [vmem:[#allocation6 + $0x18] sm:$0xf]
      %v71 = vld [vmem:[#allocation6 + $0x1c] sm:$0xf]
      %v72 = vld [vmem:[#allocation6 + $0x20] sm:$0xf]
      %v73 = vld [vmem:[#allocation6 + $0x24] sm:$0xf]
      %v74 = vld [vmem:[#allocation6 + $0x28] sm:$0xf]
      %v75 = vld [vmem:[#allocation6 + $0x2c] sm:$0xf]
      %v76 = vld [vmem:[#allocation6 + $0x30] sm:$0xf]
      %v77 = vld [vmem:[#allocation6 + $0x34] sm:$0xf]
      %v78 = vld [vmem:[#allocation6 + $0x38] sm:$0xf]
      %v79 = vld [vmem:[#allocation6 + $0x3c] sm:$0xf]
      %v80 = vld [vmem:[#allocation8] sm:$0xf]
      %v81 = vld [vmem:[#allocation8 + $0x4] sm:$0xf]
      %v82 = vld [vmem:[#allocation8 + $0x8] sm:$0xf]
      %v83 = vld [vmem:[#allocation8 + $0xc] sm:$0xf]
      %v84 = vld [vmem:[#allocation8 + $0x10] sm:$0xf]
      %v85 = vld [vmem:[#allocation8 + $0x14] sm:$0xf]
      %v86 = vld [vmem:[#allocation8 + $0x18] sm:$0xf]
      %v87 = vld [vmem:[#allocation8 + $0x1c] sm:$0xf]
      %v88 = vld [vmem:[#allocation8 + $0x20] sm:$0xf]
      %v89 = vld [vmem:[#allocation8 + $0x24] sm:$0xf]
      %v90 = vld [vmem:[#allocation8 + $0x28] sm:$0xf]
      %v91 = vld [vmem:[#allocation8 + $0x2c] sm:$0xf]
      %v92 = vld [vmem:[#allocation8 + $0x30] sm:$0xf]
      %v93 = vld [vmem:[#allocation8 + $0x34] sm:$0xf]
      %v94 = vld [vmem:[#allocation8 + $0x38] sm:$0xf]
      %v95 = vld [vmem:[#allocation8 + $0x3c] sm:$0xf]
      %v112 = vunpack.c.l.b16 %v64
      %v113 = vunpack.c.l.b16 %v65
      %v114 = vunpack.c.l.b16 %v66
      %v115 = vunpack.c.l.b16 %v67
      %v116 = vunpack.c.l.b16 %v68
      %v117 = vunpack.c.l.b16 %v69
      %v118 = vunpack.c.l.b16 %v70
      %v119 = vunpack.c.l.b16 %v71
      %v120 = vunpack.c.l.b16 %v72
      %v121 = vunpack.c.l.b16 %v73
      %v122 = vunpack.c.l.b16 %v74
      %v123 = vunpack.c.l.b16 %v75
      %v124 = vunpack.c.l.b16 %v76
      %v125 = vunpack.c.l.b16 %v77
      %v126 = vunpack.c.l.b16 %v78
      %v127 = vunpack.c.l.b16 %v79
      %v128 = vpack.c.b16 %v113, %v112
      %v129 = vpack.c.b16 %v115, %v114
      %v130 = vpack.c.b16 %v117, %v116
      %v131 = vpack.c.b16 %v119, %v118
      %v132 = vpack.c.b16 %v121, %v120
      %v133 = vpack.c.b16 %v123, %v122
      %v134 = vpack.c.b16 %v125, %v124
      %v135 = vpack.c.b16 %v127, %v126
      %v160 = vunpack.c.l.b16 %v80
      %v161 = vunpack.c.l.b16 %v81
      %v162 = vunpack.c.l.b16 %v82
      %v163 = vunpack.c.l.b16 %v83
      %v164 = vunpack.c.l.b16 %v84
      %v165 = vunpack.c.l.b16 %v85
      %v166 = vunpack.c.l.b16 %v86
      %v167 = vunpack.c.l.b16 %v87
      %v168 = vunpack.c.l.b16 %v88
      %v169 = vunpack.c.l.b16 %v89
      %v170 = vunpack.c.l.b16 %v90
      %v171 = vunpack.c.l.b16 %v91
      %v172 = vunpack.c.l.b16 %v92
      %v173 = vunpack.c.l.b16 %v93
      %v174 = vunpack.c.l.b16 %v94
      %v175 = vunpack.c.l.b16 %v95
      %v176 = vpack.c.b16 %v161, %v160
      %v177 = vpack.c.b16 %v163, %v162
      %v178 = vpack.c.b16 %v165, %v164
      %v179 = vpack.c.b16 %v167, %v166
      %v180 = vpack.c.b16 %v169, %v168
      %v181 = vpack.c.b16 %v171, %v170
      %v182 = vpack.c.b16 %v173, %v172
      %v183 = vpack.c.b16 %v175, %v174
      %192 = vmatprep.subr.bf16.mxu0 0
      %193 = vmatpush1.bf16.msra.mxu0 %v176
      %194 = vmatprep.subr.bf16.mxu0 0
      %195 = vmatpush1.bf16.msra.mxu0 %v177
      %196 = vmatprep.subr.bf16.mxu0 0
      %197 = vmatpush1.bf16.msra.mxu0 %v178
      %198 = vmatprep.subr.bf16.mxu0 0
      %199 = vmatpush1.bf16.msra.mxu0 %v179
      %200 = vmatprep.subr.bf16.mxu0 0
      %201 = vmatpush1.bf16.msra.mxu0 %v180
      %202 = vmatprep.subr.bf16.mxu0 0
      %203 = vmatpush1.bf16.msra.mxu0 %v181
      %204 = vmatprep.subr.bf16.mxu0 0
      %205 = vmatpush1.bf16.msra.mxu0 %v182
      %206 = vmatprep.subr.bf16.mxu0 0
      %207 = vmatpush1.bf16.msra.mxu0 %v183
      %208 = vmatprep.subr.bf16.mxu0 0
      %209 = vmatpush1.bf16.msra.mxu0 0
      %210 = vmatprep.subr.bf16.mxu0 0
      %211 = vmatpush1.bf16.msra.mxu0 0
      %212 = vmatprep.subr.bf16.mxu0 0
      %213 = vmatpush1.bf16.msra.mxu0 0
      %214 = vmatprep.subr.bf16.mxu0 0
      %215 = vmatpush1.bf16.msra.mxu0 0
      %216 = vmatprep.subr.bf16.mxu0 0
      %217 = vmatpush1.bf16.msra.mxu0 0
      %218 = vmatprep.subr.bf16.mxu0 0
      %219 = vmatpush1.bf16.msra.mxu0 0
      %220 = vmatprep.subr.bf16.mxu0 0
      %221 = vmatpush1.bf16.msra.mxu0 0
      %222 = vmatprep.subr.bf16.mxu0 0
      %223 = vmatpush1.bf16.msra.mxu0 0
      %224 = vmatprep.mubr.bf16.mxu0 0
      %225 = vmatmul.mubr.bf16.gmra.mrb[0].mxu0 %v128
      %v226 = vpop.f32.mrb[0].mxu0
      %v227 = vadd.f32 0.0, %v226
      %v228 = vpop.f32.mrb[0].mxu0
      %v229 = vpop.f32.mrb[0].mxu0
      %v230 = vadd.f32 0.0, %v229
      %v231 = vpop.f32.mrb[0].mxu0
      %232 = vmatprep.mubr.bf16.mxu0 0
      %233 = vmatmul.mubr.bf16.gmra.mrb[0].mxu0 %v129
      %v234 = vpop.f32.mrb[0].mxu0
      %v235 = vadd.f32 0.0, %v234
      %v236 = vpop.f32.mrb[0].mxu0
      %v237 = vpop.f32.mrb[0].mxu0
      %v238 = vadd.f32 0.0, %v237
      %v239 = vpop.f32.mrb[0].mxu0
      %240 = vmatprep.mubr.bf16.mxu0 0
      %241 = vmatmul.mubr.bf16.gmra.mrb[0].mxu0 %v130
      %v242 = vpop.f32.mrb[0].mxu0
      %v243 = vadd.f32 0.0, %v242
      %v244 = vpop.f32.mrb[0].mxu0
      %v245 = vpop.f32.mrb[0].mxu0
      %v246 = vadd.f32 0.0, %v245
      %v247 = vpop.f32.mrb[0].mxu0
      %248 = vmatprep.mubr.bf16.mxu0 0
      %249 = vmatmul.mubr.bf16.gmra.mrb[0].mxu0 %v131
      %v250 = vpop.f32.mrb[0].mxu0
      %v251 = vadd.f32 0.0, %v250
      %v252 = vpop.f32.mrb[0].mxu0
      %v253 = vpop.f32.mrb[0].mxu0
      %v254 = vadd.f32 0.0, %v253
      %v255 = vpop.f32.mrb[0].mxu0
      %256 = vmatprep.mubr.bf16.mxu0 0
      %257 = vmatmul.mubr.bf16.gmra.mrb[0].mxu0 %v132
      %v258 = vpop.f32.mrb[0].mxu0
      %v259 = vadd.f32 0.0, %v258
      %v260 = vpop.f32.mrb[0].mxu0
      %v261 = vpop.f32.mrb[0].mxu0
      %v262 = vadd.f32 0.0, %v261
      %v263 = vpop.f32.mrb[0].mxu0
      %264 = vmatprep.mubr.bf16.mxu0 0
      %265 = vmatmul.mubr.bf16.gmra.mrb[0].mxu0 %v133
      %v266 = vpop.f32.mrb[0].mxu0
      %v267 = vadd.f32 0.0, %v266
      %v268 = vpop.f32.mrb[0].mxu0
      %v269 = vpop.f32.mrb[0].mxu0
      %v270 = vadd.f32 0.0, %v269
      %v271 = vpop.f32.mrb[0].mxu0
      %272 = vmatprep.mubr.bf16.mxu0 0
      %273 = vmatmul.mubr.bf16.gmra.mrb[0].mxu0 %v134
      %v274 = vpop.f32.mrb[0].mxu0
      %v275 = vadd.f32 0.0, %v274
      %v276 = vpop.f32.mrb[0].mxu0
      %v277 = vpop.f32.mrb[0].mxu0
      %v278 = vadd.f32 0.0, %v277
      %v279 = vpop.f32.mrb[0].mxu0
      %280 = vmatprep.mubr.bf16.mxu0 0
      %281 = vmatmul.mubr.bf16.gmra.mrb[0].mxu0 %v135
      %v282 = vpop.f32.mrb[0].mxu0
      %v283 = vadd.f32 0.0, %v282
      %v284 = vpop.f32.mrb[0].mxu0
      %v285 = vpop.f32.mrb[0].mxu0
      %v286 = vadd.f32 0.0, %v285
      %v287 = vpop.f32.mrb[0].mxu0
      %288 = vdwg.mxu0
      %v289 = vpack.c.bf16 %v230, %v227
      %v290 = vpack.c.bf16 %v238, %v235
      %v291 = vpack.c.bf16 %v246, %v243
      %v292 = vpack.c.bf16 %v254, %v251
      %v293 = vpack.c.bf16 %v262, %v259
      %v294 = vpack.c.bf16 %v270, %v267
      %v295 = vpack.c.bf16 %v278, %v275
      %v296 = vpack.c.bf16 %v286, %v283
      %297 = vst [vmem:[#allocation2] sm:$0xff] %v289
      %298 = vst [vmem:[#allocation2 + $0x8] sm:$0xff] %v290
      %299 = vst [vmem:[#allocation2 + $0x10] sm:$0xff] %v291
      %300 = vst [vmem:[#allocation2 + $0x18] sm:$0xff] %v292
      %301 = vst [vmem:[#allocation2 + $0x20] sm:$0xff] %v293
      %302 = vst [vmem:[#allocation2 + $0x28] sm:$0xff] %v294
      %303 = vst [vmem:[#allocation2 + $0x30] sm:$0xff] %v295
      %304 = vst [vmem:[#allocation2 + $0x38] sm:$0xff] %v296
    $region33: #{tpu_custom_call.1} parent=1 // pred_fallthru
      _
    %v305 = vld [vmem:[#allocation3] sm:$0xf]
    %v306 = vld [vmem:[#allocation3 + $0x4] sm:$0xf]
    %v307 = vld [vmem:[#allocation3 + $0x8] sm:$0xf]
    %v308 = vld [vmem:[#allocation3 + $0xc] sm:$0xf]
    %v309 = vld [vmem:[#allocation3 + $0x10] sm:$0xf]
    %v310 = vld [vmem:[#allocation3 + $0x14] sm:$0xf]
    %v311 = vld [vmem:[#allocation3 + $0x18] sm:$0xf]
    %v312 = vld [vmem:[#allocation3 + $0x1c] sm:$0xf]
    %v313 = vld [vmem:[#allocation3 + $0x20] sm:$0xf]
    %v314 = vld [vmem:[#allocation3 + $0x24] sm:$0xf]
    %v315 = vld [vmem:[#allocation3 + $0x28] sm:$0xf]
    %v316 = vld [vmem:[#allocation3 + $0x2c] sm:$0xf]
    %v317 = vld [vmem:[#allocation3 + $0x30] sm:$0xf]
    %v318 = vld [vmem:[#allocation3 + $0x34] sm:$0xf]
    %v319 = vld [vmem:[#allocation3 + $0x38] sm:$0xf]
    %v320 = vld [vmem:[#allocation3 + $0x3c] sm:$0xf]
    %v321 = vld [vmem:[#allocation2] sm:$0xff]
    %v322 = vld [vmem:[#allocation2 + $0x8] sm:$0xff]
    %v323 = vld [vmem:[#allocation2 + $0x10] sm:$0xff]
    %v324 = vld [vmem:[#allocation2 + $0x18] sm:$0xff]
    %v325 = vld [vmem:[#allocation2 + $0x20] sm:$0xff]
    %v326 = vld [vmem:[#allocation2 + $0x28] sm:$0xff]
    %v327 = vld [vmem:[#allocation2 + $0x30] sm:$0xff]
    %v328 = vld [vmem:[#allocation2 + $0x38] sm:$0xff]
    %v329 = vld [vmem:[%s3] sm:$0x1]
    %v331 = vlaneseq
    %v332 = vshrl.u32 %v331, 7
    %v333 = vsub.s32 0, %v332
    %v334 = vrot.slane %v329, %v333
    %v352 = vunpack.c.l.b16 %v305
    %v353 = vunpack.c.l.b16 %v306
    %v354 = vunpack.c.l.b16 %v307
    %v355 = vunpack.c.l.b16 %v308
    %v356 = vunpack.c.l.b16 %v309
    %v357 = vunpack.c.l.b16 %v310
    %v358 = vunpack.c.l.b16 %v311
    %v359 = vunpack.c.l.b16 %v312
    %v360 = vunpack.c.l.b16 %v313
    %v361 = vunpack.c.l.b16 %v314
    %v362 = vunpack.c.l.b16 %v315
    %v363 = vunpack.c.l.b16 %v316
    %v364 = vunpack.c.l.b16 %v317
    %v365 = vunpack.c.l.b16 %v318
    %v366 = vunpack.c.l.b16 %v319
    %v367 = vunpack.c.l.b16 %v320
    %v368 = vpack.c.b16 %v353, %v352
    %v369 = vpack.c.b16 %v355, %v354
    %v370 = vpack.c.b16 %v357, %v356
    %v371 = vpack.c.b16 %v359, %v358
    %v372 = vpack.c.b16 %v361, %v360
    %v373 = vpack.c.b16 %v363, %v362
    %v374 = vpack.c.b16 %v365, %v364
    %v375 = vpack.c.b16 %v367, %v366
    %384 = vmatprep.subr.bf16.mxu0 0
    %385 = vmatpush1.bf16.msra.mxu0 %v321
    %386 = vmatprep.subr.bf16.mxu0 0
    %387 = vmatpush1.bf16.msra.mxu0 %v322
    %388 = vmatprep.subr.bf16.mxu0 0
    %389 = vmatpush1.bf16.msra.mxu0 %v323
    %390 = vmatprep.subr.bf16.mxu0 0
    %391 = vmatpush1.bf16.msra.mxu0 %v324
    %392 = vmatprep.subr.bf16.mxu0 0
    %393 = vmatpush1.bf16.msra.mxu0 %v325
    %394 = vmatprep.subr.bf16.mxu0 0
    %395 = vmatpush1.bf16.msra.mxu0 %v326
    %396 = vmatprep.subr.bf16.mxu0 0
    %397 = vmatpush1.bf16.msra.mxu0 %v327
    %398 = vmatprep.subr.bf16.mxu0 0
    %399 = vmatpush1.bf16.msra.mxu0 %v328
    %400 = vmatprep.subr.bf16.mxu0 0
    %401 = vmatpush1.bf16.msra.mxu0 0
    %402 = vmatprep.subr.bf16.mxu0 0
    %403 = vmatpush1.bf16.msra.mxu0 0
    %404 = vmatprep.subr.bf16.mxu0 0
    %405 = vmatpush1.bf16.msra.mxu0 0
    %406 = vmatprep.subr.bf16.mxu0 0
    %407 = vmatpush1.bf16.msra.mxu0 0
    %408 = vmatprep.subr.bf16.mxu0 0
    %409 = vmatpush1.bf16.msra.mxu0 0
    %410 = vmatprep.subr.bf16.mxu0 0
    %411 = vmatpush1.bf16.msra.mxu0 0
    %412 = vmatprep.subr.bf16.mxu0 0
    %413 = vmatpush1.bf16.msra.mxu0 0
    %414 = vmatprep.subr.bf16.mxu0 0
    %415 = vmatpush1.bf16.msra.mxu0 0
    %416 = vmatprep.mubr.bf16.mxu0 0
    %417 = vmatmul.mubr.bf16.gmra.mrb[0].mxu0 %v368
    %v418 = vpop.f32.mrb[0].mxu0
    %v419 = vadd.f32 %v334, %v418
    %v420 = vpop.f32.mrb[0].mxu0
    %v421 = vpop.f32.mrb[0].mxu0
    %v422 = vadd.f32 %v334, %v421
    %v423 = vpop.f32.mrb[0].mxu0
    %424 = vmatprep.mubr.bf16.mxu0 0
    %425 = vmatmul.mubr.bf16.gmra.mrb[0].mxu0 %v369
    %v426 = vpop.f32.mrb[0].mxu0
    %v427 = vadd.f32 %v334, %v426
    %v428 = vpop.f32.mrb[0].mxu0
    %v429 = vpop.f32.mrb[0].mxu0
    %v430 = vadd.f32 %v334, %v429
    %v431 = vpop.f32.mrb[0].mxu0
    %432 = vmatprep.mubr.bf16.mxu0 0
    %433 = vmatmul.mubr.bf16.gmra.mrb[0].mxu0 %v370
    %v434 = vpop.f32.mrb[0].mxu0
    %v435 = vadd.f32 %v334, %v434
    %v436 = vpop.f32.mrb[0].mxu0
    %v437 = vpop.f32.mrb[0].mxu0
    %v438 = vadd.f32 %v334, %v437
    %v439 = vpop.f32.mrb[0].mxu0
    %440 = vmatprep.mubr.bf16.mxu0 0
    %441 = vmatmul.mubr.bf16.gmra.mrb[0].mxu0 %v371
    %v442 = vpop.f32.mrb[0].mxu0
    %v443 = vadd.f32 %v334, %v442
    %v444 = vpop.f32.mrb[0].mxu0
    %v445 = vpop.f32.mrb[0].mxu0
    %v446 = vadd.f32 %v334, %v445
    %v447 = vpop.f32.mrb[0].mxu0
    %448 = vmatprep.mubr.bf16.mxu0 0
    %449 = vmatmul.mubr.bf16.gmra.mrb[0].mxu0 %v372
    %v450 = vpop.f32.mrb[0].mxu0
    %v451 = vadd.f32 %v334, %v450
    %v452 = vpop.f32.mrb[0].mxu0
    %v453 = vpop.f32.mrb[0].mxu0
    %v454 = vadd.f32 %v334, %v453
    %v455 = vpop.f32.mrb[0].mxu0
    %456 = vmatprep.mubr.bf16.mxu0 0
    %457 = vmatmul.mubr.bf16.gmra.mrb[0].mxu0 %v373
    %v458 = vpop.f32.mrb[0].mxu0
    %v459 = vadd.f32 %v334, %v458
    %v460 = vpop.f32.mrb[0].mxu0
    %v461 = vpop.f32.mrb[0].mxu0
    %v462 = vadd.f32 %v334, %v461
    %v463 = vpop.f32.mrb[0].mxu0
    %464 = vmatprep.mubr.bf16.mxu0 0
    %465 = vmatmul.mubr.bf16.gmra.mrb[0].mxu0 %v374
    %v466 = vpop.f32.mrb[0].mxu0
    %v467 = vadd.f32 %v334, %v466
    %v468 = vpop.f32.mrb[0].mxu0
    %v469 = vpop.f32.mrb[0].mxu0
    %v470 = vadd.f32 %v334, %v469
    %v471 = vpop.f32.mrb[0].mxu0
    %472 = vmatprep.mubr.bf16.mxu0 0
    %473 = vmatmul.mubr.bf16.gmra.mrb[0].mxu0 %v375
    %v474 = vpop.f32.mrb[0].mxu0
    %v475 = vadd.f32 %v334, %v474
    %v476 = vpop.f32.mrb[0].mxu0
    %v477 = vpop.f32.mrb[0].mxu0
    %v478 = vadd.f32 %v334, %v477
    %v479 = vpop.f32.mrb[0].mxu0
    %480 = vdwg.mxu0
    %v481 = vmax.f32 %v419, 0.0
    %v482 = vmax.f32 %v422, 0.0
    %v483 = vmax.f32 %v427, 0.0
    %v484 = vmax.f32 %v430, 0.0
    %v485 = vmax.f32 %v435, 0.0
    %v486 = vmax.f32 %v438, 0.0
    %v487 = vmax.f32 %v443, 0.0
    %v488 = vmax.f32 %v446, 0.0
    %v489 = vmax.f32 %v451, 0.0
    %v490 = vmax.f32 %v454, 0.0
    %v491 = vmax.f32 %v459, 0.0
    %v492 = vmax.f32 %v462, 0.0
    %v493 = vmax.f32 %v467, 0.0
    %v494 = vmax.f32 %v470, 0.0
    %v495 = vmax.f32 %v475, 0.0
    %v496 = vmax.f32 %v478, 0.0
    %v497 = vpack.c.bf16 %v482, %v481
    %v498 = vpack.c.bf16 %v484, %v483
    %v499 = vpack.c.bf16 %v486, %v485
    %v500 = vpack.c.bf16 %v488, %v487
    %v501 = vpack.c.bf16 %v490, %v489
    %v502 = vpack.c.bf16 %v492, %v491
    %v503 = vpack.c.bf16 %v494, %v493
    %v504 = vpack.c.bf16 %v496, %v495
    %v513 = vunpack.c.l.b16 %v497
    %v514 = vunpack.c.h.b16 %v497
    %v515 = vunpack.c.l.b16 %v498
    %v516 = vunpack.c.h.b16 %v498
    %v517 = vunpack.c.l.b16 %v499
    %v518 = vunpack.c.h.b16 %v499
    %v519 = vunpack.c.l.b16 %v500
    %v520 = vunpack.c.h.b16 %v500
    %v521 = vunpack.c.l.b16 %v501
    %v522 = vunpack.c.h.b16 %v501
    %v523 = vunpack.c.l.b16 %v502
    %v524 = vunpack.c.h.b16 %v502
    %v525 = vunpack.c.l.b16 %v503
    %v526 = vunpack.c.h.b16 %v503
    %v527 = vunpack.c.l.b16 %v504
    %v528 = vunpack.c.h.b16 %v504
    %v529 = vpack.c.b16 %v513, %v513
    %v530 = vpack.c.b16 %v514, %v514
    %v531 = vpack.c.b16 %v515, %v515
    %v532 = vpack.c.b16 %v516, %v516
    %v533 = vpack.c.b16 %v517, %v517
    %v534 = vpack.c.b16 %v518, %v518
    %v535 = vpack.c.b16 %v519, %v519
    %v536 = vpack.c.b16 %v520, %v520
    %v537 = vpack.c.b16 %v521, %v521
    %v538 = vpack.c.b16 %v522, %v522
    %v539 = vpack.c.b16 %v523, %v523
    %v540 = vpack.c.b16 %v524, %v524
    %v541 = vpack.c.b16 %v525, %v525
    %v542 = vpack.c.b16 %v526, %v526
    %v543 = vpack.c.b16 %v527, %v527
    %v544 = vpack.c.b16 %v528, %v528
    %561 = vst [vmem:[#allocation9] sm:$0xf] %v529
    %562 = vst [vmem:[#allocation9 + $0x4] sm:$0xf] %v530
    %563 = vst [vmem:[#allocation9 + $0x8] sm:$0xf] %v531
    %564 = vst [vmem:[#allocation9 + $0xc] sm:$0xf] %v532
    %565 = vst [vmem:[#allocation9 + $0x10] sm:$0xf] %v533
    %566 = vst [vmem:[#allocation9 + $0x14] sm:$0xf] %v534
    %567 = vst [vmem:[#allocation9 + $0x18] sm:$0xf] %v535
    %568 = vst [vmem:[#allocation9 + $0x1c] sm:$0xf] %v536
    %569 = vst [vmem:[#allocation9 + $0x20] sm:$0xf] %v537
    %570 = vst [vmem:[#allocation9 + $0x24] sm:$0xf] %v538
    %571 = vst [vmem:[#allocation9 + $0x28] sm:$0xf] %v539
    %572 = vst [vmem:[#allocation9 + $0x2c] sm:$0xf] %v540
    %573 = vst [vmem:[#allocation9 + $0x30] sm:$0xf] %v541
    %574 = vst [vmem:[#allocation9 + $0x34] sm:$0xf] %v542
    %575 = vst [vmem:[#allocation9 + $0x38] sm:$0xf] %v543
    %576 = vst [vmem:[#allocation9 + $0x3c] sm:$0xf] %v544
    // Predicated region
    $region34: #{tpu_custom_call.1} parent=1 // pred_check
      _
    $region35: #{tpu_custom_call.1} parent=1 // pred_check_branch
      %578 = sbr.rel (0) target = $region37
    $region36: #{tpu_custom_call.1} parent=1 // pred_region
      %s580 = ssub.s32 1024, 1024
      %581 = vsyncadd [#allocation5], %s580
      %s582 = sshll.u32 [#allocation9], 4
      %s583 = int_to_ptr.vmem [resolvable:$true] %s582
      %588 = dma.vmem_to_hbm [thread:$0]  %s583, 1024, %s4, [#allocation5], 64, 64, 4
    $region37: #{tpu_custom_call.1} parent=1 // pred_fallthru
      _
    // Predicated region
    $region38: #{tpu_custom_call.1} parent=1 // pred_check
      _
    $region39: #{tpu_custom_call.1} parent=1 // pred_check_branch
      %590 = sbr.rel (0) target = $region41
    $region40: #{tpu_custom_call.1} parent=1 // pred_region
      %591 = dma.done [#allocation5], 1024
    $region41: #{tpu_custom_call.1} parent=1 // pred_fallthru
      _
    %592 = vsyncpa [#allocation4], 1
    %593 = vsyncpa [#allocation7], 1
    %594 = vsyncpa [#allocation5], 1

</llo_original>
